<compile_context>
chip_gen: v7x
topology: tpu7x:2x2x1
jax: 0.10.0
libtpu: 0.0.40
codegen_flags: <defaults>
</compile_context>

<pallas_src>
import functools

import jax
import jax.numpy as jnp
from jax import lax
from jax.experimental import pallas as pl
from jax.experimental.pallas import tpu as pltpu


# ----------------------------------------------------------------------------
# Pallas kernel: 1x1-conv classifier + WildcatPool2d (kmax=kmin=1) + sigmoid
# ----------------------------------------------------------------------------
def _wildcat_head_kernel(f_ref, w_ref, b_ref, o_ref, *, n, hw, alpha):
    # f_ref: (N*HW, C)  f32 channels-last features (whole batch)
    # w_ref: (C, Kp)    bf16 1x1-conv weight, classes zero-padded to 128 lanes
    # b_ref: (1, Kp)    f32 bias (padded lanes zero)
    # o_ref: (N, Kp)    f32 pooled + sigmoid scores (padded lanes sliced outside)
    # In-kernel bf16 cast (VPU work hidden under the MXU), f32 accumulation.
    f_bf16 = f_ref[...].astype(jnp.bfloat16)
    s = jnp.dot(f_bf16, w_ref[...],
                preferred_element_type=jnp.float32)            # (N*HW, Kp) f32
    s = s + b_ref[...]                                          # broadcast bias
    # WildcatPool2d(kmax=1, kmin=1, alpha): reference computes
    #   (mean(top-kmax) + alpha*mean(bottom-kmin)) / 2  ==  (max + alpha*min)/2
    # (the /2 is in the reference when kmin>0 and alpha!=0).
    # N is small & static -> unrolled static slices, no sublane-splitting reshape.
    # TODO(synk): general kmax/kmin > 1 needs an in-kernel spatial top-k (sort);
    #             only the default kmax=kmin=1 case is implemented here.
    rows = []
    for i in range(n):
        blk = s[i * hw:(i + 1) * hw, :]                         # (HW, Kp), static slice
        rows.append((jnp.max(blk, axis=0, keepdims=True)
                     + alpha * jnp.min(blk, axis=0, keepdims=True)) * 0.5)
    pooled = jnp.concatenate(rows, axis=0)                      # (N, Kp) f32
    # Batched sigmoid epilogue: one EUP exp + one approx reciprocal + one clip
    # + one full unmasked (N, Kp) store. All-f32, no bf16 intermediates.
    sig = pl.reciprocal(1.0 + jnp.exp(-pooled), approx=True)
    o_ref[...] = jnp.clip(sig, 0.0, 1.0).astype(o_ref.dtype)


def wildcat_head(features_nhwc, w_padded, b_padded, num_classes, *, alpha=1.0):
    """1x1 conv classifier + WildcatPool2d(kmax=1,kmin=1,alpha) + sigmoid.

    features_nhwc: (N, H, W, C)  backbone output (channels-last, f32).
    w_padded:      (C, Kp)       bf16 1x1-conv weight, zero-padded to 128 lanes.
    b_padded:      (1, Kp)       f32 bias, padded lanes zero.
    num_classes:   static K; output is sliced back to (N, K).
    Returns (N, K) float32 scores in [0, 1].
    """
    N, H, W, C = features_nhwc.shape
    Kp = w_padded.shape[1]
    HW = H * W

    # Channels-last already: free reshape, no transpose copy, NO wrapper cast.
    f = features_nhwc.reshape(N * HW, C)

    in_bytes = f.size * 4 + w_padded.size * 2 + b_padded.size * 4
    out_bytes = N * Kp * 4
    vmem_limit = int(max(8 * 1024 * 1024, 4 * (in_bytes + out_bytes)))

    # NOTE: alpha is baked in at trace time (fixed hyperparameter of the module);
    # sweeping alpha would retrace/recompile.
    # NOTE(v7x): at realistic ResNet feature sizes (C=512, big batch) add an
    # M-tile grid over N*HW (+ Buffered(1)) so the feature slab respects the
    # smaller 64 MiB VMEM; at these shapes the whole-batch slab is tiny.
    kernel = functools.partial(_wildcat_head_kernel, n=N, hw=HW, alpha=float(alpha))
    out = pl.pallas_call(
        kernel,
        out_shape=jax.ShapeDtypeStruct((N, Kp), jnp.float32),
        grid=(1,),  # single step: whole batch in one invocation
        in_specs=[
            pl.BlockSpec((N * HW, C), lambda i: (0, 0)),
            pl.BlockSpec((C, Kp), lambda i: (0, 0)),
            pl.BlockSpec((1, Kp), lambda i: (0, 0)),
        ],
        out_specs=pl.BlockSpec((N, Kp), lambda i: (0, 0)),
        compiler_params=pltpu.CompilerParams(
            dimension_semantics=("arbitrary",),
            vmem_limit_bytes=vmem_limit),
        cost_estimate=pl.CostEstimate(
            flops=2 * N * HW * C * Kp,
            transcendentals=2 * N * Kp,
            bytes_accessed=int(in_bytes + out_bytes)),
    )(f, w_padded, b_padded)
    return out[:, :num_classes]


# ----------------------------------------------------------------------------
# Plain-JAX glue: ResNet-18-style backbone (the externally supplied `model`),
# NHWC end-to-end so the head gets channels-last features for free.
# ----------------------------------------------------------------------------
LAYER_STRIDES = (1, 2, 2, 2)  # first block of layer1..layer4 (architecture const)


def conv2d(x, w, stride=1, padding=0):
    # x: NHWC, w: HWIO
    return lax.conv_general_dilated(
        x, w,
        window_strides=(stride, stride),
        padding=((padding, padding), (padding, padding)),
        dimension_numbers=("NHWC", "HWIO", "NHWC"))


def batchnorm(x, gamma, beta, mean, var, eps=1e-5):
    inv = 1.0 / jnp.sqrt(var + eps)
    scale = (gamma * inv)[None, None, None, :]
    shift = (beta - gamma * mean * inv)[None, None, None, :]
    return x * scale + shift


def maxpool_3x3_s2(x):
    return lax.reduce_window(
        x, -jnp.inf, lax.max,
        window_dimensions=(1, 3, 3, 1),
        window_strides=(1, 2, 2, 1),
        padding=((0, 0), (1, 1), (1, 1), (0, 0)))


def _init_conv(key, out_c, in_c, k):
    fan_in = in_c * k * k
    return jax.random.normal(key, (k, k, in_c, out_c), jnp.float32) / jnp.sqrt(fan_in)


def _init_bn(key, c):
    k1, k2 = jax.random.split(key)
    return dict(
        gamma=1.0 + 0.1 * jax.random.normal(k1, (c,), jnp.float32),
        beta=0.1 * jax.random.normal(k2, (c,), jnp.float32),
        mean=jnp.zeros((c,), jnp.float32),
        var=jnp.ones((c,), jnp.float32))


def _init_basic_block(key, in_c, out_c, stride):
    ks = jax.random.split(key, 6)
    p = dict(
        conv1=_init_conv(ks[0], out_c, in_c, 3), bn1=_init_bn(ks[1], out_c),
        conv2=_init_conv(ks[2], out_c, out_c, 3), bn2=_init_bn(ks[3], out_c))
    if stride != 1 or in_c != out_c:
        p["down_conv"] = _init_conv(ks[4], out_c, in_c, 1)
        p["down_bn"] = _init_bn(ks[5], out_c)
    return p


def _basic_block(x, p, stride):
    identity = x
    out = conv2d(x, p["conv1"], stride=stride, padding=1)
    out = jax.nn.relu(batchnorm(out, **p["bn1"]))
    out = conv2d(out, p["conv2"], stride=1, padding=1)
    out = batchnorm(out, **p["bn2"])
    if "down_conv" in p:
        identity = batchnorm(
            conv2d(x, p["down_conv"], stride=stride, padding=0), **p["down_bn"])
    return jax.nn.relu(out + identity)


def init_params(key, *, num_classes, widths=(8, 8, 16, 32, 64)):
    stem_c, c1, c2, c3, c4 = widths
    keys = jax.random.split(key, 16)
    params = dict(
        conv1=_init_conv(keys[0], stem_c, 3, 7),
        bn1=_init_bn(keys[1], stem_c),
        layers=[],
    )
    in_c = stem_c
    layer_widths = (c1, c2, c3, c4)
    ki = 2
    for li, out_c in enumerate(layer_widths):
        stride = LAYER_STRIDES[li]
        blocks = [_init_basic_block(keys[ki], in_c, out_c, stride),
                  _init_basic_block(keys[ki + 1], out_c, out_c, 1)]
        params["layers"].append(blocks)
        in_c = out_c
        ki += 2
    # num_features = model.layer4[1].conv1.in_channels == c4
    # Classifier weight/bias stored PRE-PADDED / PRE-CAST in the layout the MXU
    # wants: (C, Kp=128) bf16 weight, (1, Kp) f32 bias.  No per-call pad/cast.
    Kp = 128 * pl.cdiv(num_classes, 128)
    w = jax.random.normal(keys[ki], (c4, num_classes), jnp.float32) / jnp.sqrt(c4)
    b = 0.05 * jax.random.normal(keys[ki + 1], (num_classes,), jnp.float32)
    params["cls_w"] = (jnp.zeros((c4, Kp), jnp.bfloat16)
                       .at[:, :num_classes].set(w.astype(jnp.bfloat16)))
    params["cls_b"] = (jnp.zeros((1, Kp), jnp.float32)
                       .at[0, :num_classes].set(b))
    return params


def resnet_wild_forward(params, x_nchw, *, num_classes, alpha=1.0):
    # Accept the PyTorch-convention NCHW image batch; go channels-last once,
    # on the raw image (cheap), so the whole backbone + head stays NHWC.
    x = jnp.transpose(x_nchw, (0, 2, 3, 1))
    # --- features: conv1, bn1, relu, maxpool, layer1..layer4 ---
    h = conv2d(x, params["conv1"], stride=2, padding=3)
    h = jax.nn.relu(batchnorm(h, **params["bn1"]))
    h = maxpool_3x3_s2(h)
    for li, blocks in enumerate(params["layers"]):
        for blk, stride in zip(blocks, (LAYER_STRIDES[li], 1)):
            h = _basic_block(h, blk, stride)
    # --- classifier (1x1 conv) + WildcatPool2d + sigmoid: Pallas kernel ---
    return wildcat_head(h, params["cls_w"], params["cls_b"], num_classes,
                        alpha=alpha)


if __name__ == "__main__":
    key = jax.random.PRNGKey(0)
    k_params, k_x = jax.random.split(key)

    num_classes = 8
    params = init_params(k_params, num_classes=num_classes)

    # Small NCHW input consistent with the module (RGB image batch).
    x = jax.random.normal(k_x, (2, 3, 64, 64), jnp.float32)

    fwd = jax.jit(resnet_wild_forward, static_argnames=("num_classes", "alpha"))
    out = jax.block_until_ready(fwd(params, x, num_classes=num_classes))

    assert out.shape == (2, num_classes), out.shape
    assert bool(jnp.all((out >= 0.0) & (out <= 1.0)))
    print("KERNEL_OK")
</pallas_src>

<mosaic_0001>
module attributes {stable_mosaic.version = 11 : i64} {
  func.func @_wildcat_head_kernel(%arg0: i32, %arg1: memref<8x64xf32, #tpu.memory_space<vmem>>, %arg2: memref<64x128xbf16, #tpu.memory_space<vmem>>, %arg3: memref<1x128xf32, #tpu.memory_space<vmem>>, %arg4: memref<2x128xf32, #tpu.memory_space<vmem>>) attributes {dimension_semantics = [#tpu.dimension_semantics<arbitrary>], iteration_bounds = array<i64: 1>, scalar_prefetch = 0 : i64, scratch_operands = 0 : i64, tpu.core_type = #tpu.core_type<tc>, window_params = [{pipeline_mode = #tpu.pipeline_mode<synchronous>, transform_indices = @transform_0, window_bounds = array<i64: 8, 64>}, {pipeline_mode = #tpu.pipeline_mode<synchronous>, transform_indices = @transform_1, window_bounds = array<i64: 64, 128>}, {pipeline_mode = #tpu.pipeline_mode<synchronous>, transform_indices = @transform_2, window_bounds = array<i64: 1, 128>}, {pipeline_mode = #tpu.pipeline_mode<synchronous>, transform_indices = @transform_3, window_bounds = array<i64: 2, 128>}]} {
    %c0 = arith.constant 0 : index
    %c0_0 = arith.constant 0 : index
    %0 = vector.load %arg1[%c0, %c0_0] : memref<8x64xf32, #tpu.memory_space<vmem>>, vector<8x64xf32>
    %1 = arith.truncf %0 : vector<8x64xf32> to vector<8x64xbf16>
    %c0_1 = arith.constant 0 : index
    %c0_2 = arith.constant 0 : index
    %2 = vector.load %arg2[%c0_1, %c0_2] : memref<64x128xbf16, #tpu.memory_space<vmem>>, vector<64x128xbf16>
    %cst = arith.constant dense<0.000000e+00> : vector<8x128xf32>
    %3 = tpu.matmul %1, %2, %cst {dimension_numbers = #tpu.dot_dimension_numbers<[1], [0], [0], [1], [0, 0, 1, 1], [], []>} : vector<8x64xbf16>, vector<64x128xbf16>, vector<8x128xf32> -> vector<8x128xf32>
    %c0_3 = arith.constant 0 : index
    %c0_4 = arith.constant 0 : index
    %4 = vector.load %arg3[%c0_3, %c0_4] : memref<1x128xf32, #tpu.memory_space<vmem>>, vector<1x128xf32>
    %5 = vector.broadcast %4 : vector<1x128xf32> to vector<8x128xf32>
    %6 = arith.addf %3, %5 : vector<8x128xf32>
    %7 = vector.extract_strided_slice %6 {offsets = [0, 0], sizes = [4, 128], strides = [1, 1]} : vector<8x128xf32> to vector<4x128xf32>
    %cst_5 = arith.constant dense<0xFF800000> : vector<128xf32>
    %8 = vector.multi_reduction <maximumf>, %7, %cst_5 [0] : vector<4x128xf32> to vector<128xf32>
    %9 = vector.shape_cast %8 : vector<128xf32> to vector<1x128xf32>
    %cst_6 = arith.constant dense<0x7F800000> : vector<128xf32>
    %10 = vector.multi_reduction <minimumf>, %7, %cst_6 [0] : vector<4x128xf32> to vector<128xf32>
    %11 = vector.shape_cast %10 : vector<128xf32> to vector<1x128xf32>
    %cst_7 = arith.constant 1.000000e+00 : f32
    %12 = vector.broadcast %cst_7 : f32 to vector<1x128xf32>
    %13 = arith.mulf %12, %11 : vector<1x128xf32>
    %14 = arith.addf %9, %13 : vector<1x128xf32>
    %cst_8 = arith.constant 5.000000e-01 : f32
    %15 = vector.broadcast %cst_8 : f32 to vector<1x128xf32>
    %16 = arith.mulf %14, %15 : vector<1x128xf32>
    %17 = vector.extract_strided_slice %6 {offsets = [4, 0], sizes = [4, 128], strides = [1, 1]} : vector<8x128xf32> to vector<4x128xf32>
    %cst_9 = arith.constant dense<0xFF800000> : vector<128xf32>
    %18 = vector.multi_reduction <maximumf>, %17, %cst_9 [0] : vector<4x128xf32> to vector<128xf32>
    %19 = vector.shape_cast %18 : vector<128xf32> to vector<1x128xf32>
    %cst_10 = arith.constant dense<0x7F800000> : vector<128xf32>
    %20 = vector.multi_reduction <minimumf>, %17, %cst_10 [0] : vector<4x128xf32> to vector<128xf32>
    %21 = vector.shape_cast %20 : vector<128xf32> to vector<1x128xf32>
    %cst_11 = arith.constant 1.000000e+00 : f32
    %22 = vector.broadcast %cst_11 : f32 to vector<1x128xf32>
    %23 = arith.mulf %22, %21 : vector<1x128xf32>
    %24 = arith.addf %19, %23 : vector<1x128xf32>
    %cst_12 = arith.constant 5.000000e-01 : f32
    %25 = vector.broadcast %cst_12 : f32 to vector<1x128xf32>
    %26 = arith.mulf %24, %25 : vector<1x128xf32>
    %27 = tpu.concatenate %16, %26 in 0 : vector<1x128xf32>, vector<1x128xf32> -> vector<2x128xf32>
    %cst_13 = arith.constant 0.000000e+00 : f32
    %28 = vector.broadcast %cst_13 : f32 to vector<2x128xf32>
    %29 = arith.subf %28, %27 : vector<2x128xf32>
    %30 = math.exp %29 : vector<2x128xf32>
    %cst_14 = arith.constant 1.000000e+00 : f32
    %31 = vector.broadcast %cst_14 : f32 to vector<2x128xf32>
    %32 = arith.addf %31, %30 : vector<2x128xf32>
    %33 = tpu.reciprocal %32 {approx = true} : vector<2x128xf32> -> vector<2x128xf32>
    %cst_15 = arith.constant 0.000000e+00 : f32
    %cst_16 = arith.constant 1.000000e+00 : f32
    %34 = vector.broadcast %cst_15 : f32 to vector<2x128xf32>
    %35 = arith.maximumf %34, %33 : vector<2x128xf32>
    %36 = vector.broadcast %cst_16 : f32 to vector<2x128xf32>
    %37 = arith.minimumf %36, %35 : vector<2x128xf32>
    %c0_17 = arith.constant 0 : index
    %c0_18 = arith.constant 0 : index
    %38 = vector.load %arg4[%c0_17, %c0_18] : memref<2x128xf32, #tpu.memory_space<vmem>>, vector<2x128xf32>
    tpu.vector_store %arg4[%c0_17, %c0_18], %37 {strides = array<i32>} : memref<2x128xf32, #tpu.memory_space<vmem>>, vector<2x128xf32>,
    return
  }
  func.func @transform_0(%arg0: i32) -> (i32, i32) {
    %c0_i32 = arith.constant 0 : i32
    %c0_i32_0 = arith.constant 0 : i32
    %c0_i32_1 = arith.constant 0 : i32
    return %c0_i32, %c0_i32_0 : i32, i32
  }
  func.func @transform_1(%arg0: i32) -> (i32, i32) {
    %c0_i32 = arith.constant 0 : i32
    %c0_i32_0 = arith.constant 0 : i32
    %c0_i32_1 = arith.constant 0 : i32
    return %c0_i32, %c0_i32_0 : i32, i32
  }
  func.func @transform_2(%arg0: i32) -> (i32, i32) {
    %c0_i32 = arith.constant 0 : i32
    %c0_i32_0 = arith.constant 0 : i32
    %c0_i32_1 = arith.constant 0 : i32
    return %c0_i32, %c0_i32_0 : i32, i32
  }
  func.func @transform_3(%arg0: i32) -> (i32, i32) {
    %c0_i32 = arith.constant 0 : i32
    %c0_i32_0 = arith.constant 0 : i32
    %c0_i32_1 = arith.constant 0 : i32
    return %c0_i32, %c0_i32_0 : i32, i32
  }
}

</mosaic_0001>

<llo_original>
// kernel: reverse
$region0: #{reverse}
  #allocation0 [shape = 's32[1]{0}', space=sflag, size = 0x4, scoped, tag = 'scoped memory for reverse']
  %s0 = inlined_call_operand.vmem [shape: f32[3,3,64,64], index: 0, kind: input, shape index: {}]
  %s1 = inlined_call_operand.vmem [shape: bf16[3,3,64,64], index: 1, kind: output, shape index: {}]
  %s2 = scalar_lea.vmem %s0, 512
  %v3 = vld [vmem:[%s2] sm:$0xff]
  %v4 = vpack.c.bf16 0.0, %v3
  %5 = vst [vmem:[%s1] sm:$0xf] %v4
  %s6 = scalar_lea.vmem %s0, 320
  %v7 = vld [vmem:[%s6] sm:$0xff]
  %s8 = scalar_lea.vmem %s1, 96
  %v9 = vpack.c.bf16 0.0, %v7
  %10 = vst [vmem:[%s8] sm:$0xf] %v9
  %s11 = scalar_lea.vmem %s0, 128
  %v12 = vld [vmem:[%s11] sm:$0xff]
  %s13 = scalar_lea.vmem %s1, 192
  %v14 = vpack.c.bf16 0.0, %v12
  %15 = vst [vmem:[%s13] sm:$0xf] %v14
  %s16 = scalar_lea.vmem %s0, 448
  %v17 = vld [vmem:[%s16] sm:$0xff]
  %s18 = scalar_lea.vmem %s1, 32
  %v19 = vpack.c.bf16 0.0, %v17
  %20 = vst [vmem:[%s18] sm:$0xf] %v19
  %s21 = scalar_lea.vmem %s0, 256
  %v22 = vld [vmem:[%s21] sm:$0xff]
  %s23 = scalar_lea.vmem %s1, 128
  %v24 = vpack.c.bf16 0.0, %v22
  %25 = vst [vmem:[%s23] sm:$0xf] %v24
  %s26 = scalar_lea.vmem %s0, 64
  %v27 = vld [vmem:[%s26] sm:$0xff]
  %s28 = scalar_lea.vmem %s1, 224
  %v29 = vpack.c.bf16 0.0, %v27
  %30 = vst [vmem:[%s28] sm:$0xf] %v29
  %s31 = scalar_lea.vmem %s0, 384
  %v32 = vld [vmem:[%s31] sm:$0xff]
  %s33 = scalar_lea.vmem %s1, 64
  %v34 = vpack.c.bf16 0.0, %v32
  %35 = vst [vmem:[%s33] sm:$0xf] %v34
  %s36 = scalar_lea.vmem %s0, 192
  %v37 = vld [vmem:[%s36] sm:$0xff]
  %s38 = scalar_lea.vmem %s1, 160
  %v39 = vpack.c.bf16 0.0, %v37
  %40 = vst [vmem:[%s38] sm:$0xf] %v39
  %v41 = vld [vmem:[%s0] sm:$0xff]
  %s42 = scalar_lea.vmem %s1, 256
  %v43 = vpack.c.bf16 0.0, %v41
  %44 = vst [vmem:[%s42] sm:$0xf] %v43
  %s45 = scalar_lea.vmem %s0, 520
  %v46 = vld [vmem:[%s45] sm:$0xff]
  %s47 = scalar_lea.vmem %s1, 4
  %v48 = vpack.c.bf16 0.0, %v46
  %49 = vst [vmem:[%s47] sm:$0xf] %v48
  %s50 = scalar_lea.vmem %s0, 328
  %v51 = vld [vmem:[%s50] sm:$0xff]
  %s52 = scalar_lea.vmem %s1, 100
  %v53 = vpack.c.bf16 0.0, %v51
  %54 = vst [vmem:[%s52] sm:$0xf] %v53
  %s55 = scalar_lea.vmem %s0, 136
  %v56 = vld [vmem:[%s55] sm:$0xff]
  %s57 = scalar_lea.vmem %s1, 196
  %v58 = vpack.c.bf16 0.0, %v56
  %59 = vst [vmem:[%s57] sm:$0xf] %v58
  %s60 = scalar_lea.vmem %s0, 456
  %v61 = vld [vmem:[%s60] sm:$0xff]
  %s62 = scalar_lea.vmem %s1, 36
  %v63 = vpack.c.bf16 0.0, %v61
  %64 = vst [vmem:[%s62] sm:$0xf] %v63
  %s65 = scalar_lea.vmem %s0, 264
  %v66 = vld [vmem:[%s65] sm:$0xff]
  %s67 = scalar_lea.vmem %s1, 132
  %v68 = vpack.c.bf16 0.0, %v66
  %69 = vst [vmem:[%s67] sm:$0xf] %v68
  %s70 = scalar_lea.vmem %s0, 72
  %v71 = vld [vmem:[%s70] sm:$0xff]
  %s72 = scalar_lea.vmem %s1, 228
  %v73 = vpack.c.bf16 0.0, %v71
  %74 = vst [vmem:[%s72] sm:$0xf] %v73
  %s75 = scalar_lea.vmem %s0, 392
  %v76 = vld [vmem:[%s75] sm:$0xff]
  %s77 = scalar_lea.vmem %s1, 68
  %v78 = vpack.c.bf16 0.0, %v76
  %79 = vst [vmem:[%s77] sm:$0xf] %v78
  %s80 = scalar_lea.vmem %s0, 200
  %v81 = vld [vmem:[%s80] sm:$0xff]
  %s82 = scalar_lea.vmem %s1, 164
  %v83 = vpack.c.bf16 0.0, %v81
  %84 = vst [vmem:[%s82] sm:$0xf] %v83
  %s85 = scalar_lea.vmem %s0, 8
  %v86 = vld [vmem:[%s85] sm:$0xff]
  %s87 = scalar_lea.vmem %s1, 260
  %v88 = vpack.c.bf16 0.0, %v86
  %89 = vst [vmem:[%s87] sm:$0xf] %v88
  %s90 = scalar_lea.vmem %s0, 528
  %v91 = vld [vmem:[%s90] sm:$0xff]
  %s92 = scalar_lea.vmem %s1, 8
  %v93 = vpack.c.bf16 0.0, %v91
  %94 = vst [vmem:[%s92] sm:$0xf] %v93
  %s95 = scalar_lea.vmem %s0, 336
  %v96 = vld [vmem:[%s95] sm:$0xff]
  %s97 = scalar_lea.vmem %s1, 104
  %v98 = vpack.c.bf16 0.0, %v96
  %99 = vst [vmem:[%s97] sm:$0xf] %v98
  %s100 = scalar_lea.vmem %s0, 144
  %v101 = vld [vmem:[%s100] sm:$0xff]
  %s102 = scalar_lea.vmem %s1, 200
  %v103 = vpack.c.bf16 0.0, %v101
  %104 = vst [vmem:[%s102] sm:$0xf] %v103
  %s105 = scalar_lea.vmem %s0, 464
  %v106 = vld [vmem:[%s105] sm:$0xff]
  %s107 = scalar_lea.vmem %s1, 40
  %v108 = vpack.c.bf16 0.0, %v106
  %109 = vst [vmem:[%s107] sm:$0xf] %v108
  %s110 = scalar_lea.vmem %s0, 272
  %v111 = vld [vmem:[%s110] sm:$0xff]
  %s112 = scalar_lea.vmem %s1, 136
  %v113 = vpack.c.bf16 0.0, %v111
  %114 = vst [vmem:[%s112] sm:$0xf] %v113
  %s115 = scalar_lea.vmem %s0, 80
  %v116 = vld [vmem:[%s115] sm:$0xff]
  %s117 = scalar_lea.vmem %s1, 232
  %v118 = vpack.c.bf16 0.0, %v116
  %119 = vst [vmem:[%s117] sm:$0xf] %v118
  %s120 = scalar_lea.vmem %s0, 400
  %v121 = vld [vmem:[%s120] sm:$0xff]
  %s122 = scalar_lea.vmem %s1, 72
  %v123 = vpack.c.bf16 0.0, %v121
  %124 = vst [vmem:[%s122] sm:$0xf] %v123
  %s125 = scalar_lea.vmem %s0, 208
  %v126 = vld [vmem:[%s125] sm:$0xff]
  %s127 = scalar_lea.vmem %s1, 168
  %v128 = vpack.c.bf16 0.0, %v126
  %129 = vst [vmem:[%s127] sm:$0xf] %v128
  %s130 = scalar_lea.vmem %s0, 16
  %v131 = vld [vmem:[%s130] sm:$0xff]
  %s132 = scalar_lea.vmem %s1, 264
  %v133 = vpack.c.bf16 0.0, %v131
  %134 = vst [vmem:[%s132] sm:$0xf] %v133
  %s135 = scalar_lea.vmem %s0, 536
  %v136 = vld [vmem:[%s135] sm:$0xff]
  %s137 = scalar_lea.vmem %s1, 12
  %v138 = vpack.c.bf16 0.0, %v136
  %139 = vst [vmem:[%s137] sm:$0xf] %v138
  %s140 = scalar_lea.vmem %s0, 344
  %v141 = vld [vmem:[%s140] sm:$0xff]
  %s142 = scalar_lea.vmem %s1, 108
  %v143 = vpack.c.bf16 0.0, %v141
  %144 = vst [vmem:[%s142] sm:$0xf] %v143
  %s145 = scalar_lea.vmem %s0, 152
  %v146 = vld [vmem:[%s145] sm:$0xff]
  %s147 = scalar_lea.vmem %s1, 204
  %v148 = vpack.c.bf16 0.0, %v146
  %149 = vst [vmem:[%s147] sm:$0xf] %v148
  %s150 = scalar_lea.vmem %s0, 472
  %v151 = vld [vmem:[%s150] sm:$0xff]
  %s152 = scalar_lea.vmem %s1, 44
  %v153 = vpack.c.bf16 0.0, %v151
  %154 = vst [vmem:[%s152] sm:$0xf] %v153
  %s155 = scalar_lea.vmem %s0, 280
  %v156 = vld [vmem:[%s155] sm:$0xff]
  %s157 = scalar_lea.vmem %s1, 140
  %v158 = vpack.c.bf16 0.0, %v156
  %159 = vst [vmem:[%s157] sm:$0xf] %v158
  %s160 = scalar_lea.vmem %s0, 88
  %v161 = vld [vmem:[%s160] sm:$0xff]
  %s162 = scalar_lea.vmem %s1, 236
  %v163 = vpack.c.bf16 0.0, %v161
  %164 = vst [vmem:[%s162] sm:$0xf] %v163
  %s165 = scalar_lea.vmem %s0, 408
  %v166 = vld [vmem:[%s165] sm:$0xff]
  %s167 = scalar_lea.vmem %s1, 76
  %v168 = vpack.c.bf16 0.0, %v166
  %169 = vst [vmem:[%s167] sm:$0xf] %v168
  %s170 = scalar_lea.vmem %s0, 216
  %v171 = vld [vmem:[%s170] sm:$0xff]
  %s172 = scalar_lea.vmem %s1, 172
  %v173 = vpack.c.bf16 0.0, %v171
  %174 = vst [vmem:[%s172] sm:$0xf] %v173
  %s175 = scalar_lea.vmem %s0, 24
  %v176 = vld [vmem:[%s175] sm:$0xff]
  %s177 = scalar_lea.vmem %s1, 268
  %v178 = vpack.c.bf16 0.0, %v176
  %179 = vst [vmem:[%s177] sm:$0xf] %v178
  %s180 = scalar_lea.vmem %s0, 544
  %v181 = vld [vmem:[%s180] sm:$0xff]
  %s182 = scalar_lea.vmem %s1, 16
  %v183 = vpack.c.bf16 0.0, %v181
  %184 = vst [vmem:[%s182] sm:$0xf] %v183
  %s185 = scalar_lea.vmem %s0, 352
  %v186 = vld [vmem:[%s185] sm:$0xff]
  %s187 = scalar_lea.vmem %s1, 112
  %v188 = vpack.c.bf16 0.0, %v186
  %189 = vst [vmem:[%s187] sm:$0xf] %v188
  %s190 = scalar_lea.vmem %s0, 160
  %v191 = vld [vmem:[%s190] sm:$0xff]
  %s192 = scalar_lea.vmem %s1, 208
  %v193 = vpack.c.bf16 0.0, %v191
  %194 = vst [vmem:[%s192] sm:$0xf] %v193
  %s195 = scalar_lea.vmem %s0, 480
  %v196 = vld [vmem:[%s195] sm:$0xff]
  %s197 = scalar_lea.vmem %s1, 48
  %v198 = vpack.c.bf16 0.0, %v196
  %199 = vst [vmem:[%s197] sm:$0xf] %v198
  %s200 = scalar_lea.vmem %s0, 288
  %v201 = vld [vmem:[%s200] sm:$0xff]
  %s202 = scalar_lea.vmem %s1, 144
  %v203 = vpack.c.bf16 0.0, %v201
  %204 = vst [vmem:[%s202] sm:$0xf] %v203
  %s205 = scalar_lea.vmem %s0, 96
  %v206 = vld [vmem:[%s205] sm:$0xff]
  %s207 = scalar_lea.vmem %s1, 240
  %v208 = vpack.c.bf16 0.0, %v206
  %209 = vst [vmem:[%s207] sm:$0xf] %v208
  %s210 = scalar_lea.vmem %s0, 416
  %v211 = vld [vmem:[%s210] sm:$0xff]
  %s212 = scalar_lea.vmem %s1, 80
  %v213 = vpack.c.bf16 0.0, %v211
  %214 = vst [vmem:[%s212] sm:$0xf] %v213
  %s215 = scalar_lea.vmem %s0, 224
  %v216 = vld [vmem:[%s215] sm:$0xff]
  %s217 = scalar_lea.vmem %s1, 176
  %v218 = vpack.c.bf16 0.0, %v216
  %219 = vst [vmem:[%s217] sm:$0xf] %v218
  %s220 = scalar_lea.vmem %s0, 32
  %v221 = vld [vmem:[%s220] sm:$0xff]
  %s222 = scalar_lea.vmem %s1, 272
  %v223 = vpack.c.bf16 0.0, %v221
  %224 = vst [vmem:[%s222] sm:$0xf] %v223
  %s225 = scalar_lea.vmem %s0, 552
  %v226 = vld [vmem:[%s225] sm:$0xff]
  %s227 = scalar_lea.vmem %s1, 20
  %v228 = vpack.c.bf16 0.0, %v226
  %229 = vst [vmem:[%s227] sm:$0xf] %v228
  %s230 = scalar_lea.vmem %s0, 360
  %v231 = vld [vmem:[%s230] sm:$0xff]
  %s232 = scalar_lea.vmem %s1, 116
  %v233 = vpack.c.bf16 0.0, %v231
  %234 = vst [vmem:[%s232] sm:$0xf] %v233
  %s235 = scalar_lea.vmem %s0, 168
  %v236 = vld [vmem:[%s235] sm:$0xff]
  %s237 = scalar_lea.vmem %s1, 212
  %v238 = vpack.c.bf16 0.0, %v236
  %239 = vst [vmem:[%s237] sm:$0xf] %v238
  %s240 = scalar_lea.vmem %s0, 488
  %v241 = vld [vmem:[%s240] sm:$0xff]
  %s242 = scalar_lea.vmem %s1, 52
  %v243 = vpack.c.bf16 0.0, %v241
  %244 = vst [vmem:[%s242] sm:$0xf] %v243
  %s245 = scalar_lea.vmem %s0, 296
  %v246 = vld [vmem:[%s245] sm:$0xff]
  %s247 = scalar_lea.vmem %s1, 148
  %v248 = vpack.c.bf16 0.0, %v246
  %249 = vst [vmem:[%s247] sm:$0xf] %v248
  %s250 = scalar_lea.vmem %s0, 104
  %v251 = vld [vmem:[%s250] sm:$0xff]
  %s252 = scalar_lea.vmem %s1, 244
  %v253 = vpack.c.bf16 0.0, %v251
  %254 = vst [vmem:[%s252] sm:$0xf] %v253
  %s255 = scalar_lea.vmem %s0, 424
  %v256 = vld [vmem:[%s255] sm:$0xff]
  %s257 = scalar_lea.vmem %s1, 84
  %v258 = vpack.c.bf16 0.0, %v256
  %259 = vst [vmem:[%s257] sm:$0xf] %v258
  %s260 = scalar_lea.vmem %s0, 232
  %v261 = vld [vmem:[%s260] sm:$0xff]
  %s262 = scalar_lea.vmem %s1, 180
  %v263 = vpack.c.bf16 0.0, %v261
  %264 = vst [vmem:[%s262] sm:$0xf] %v263
  %s265 = scalar_lea.vmem %s0, 40
  %v266 = vld [vmem:[%s265] sm:$0xff]
  %s267 = scalar_lea.vmem %s1, 276
  %v268 = vpack.c.bf16 0.0, %v266
  %269 = vst [vmem:[%s267] sm:$0xf] %v268
  %s270 = scalar_lea.vmem %s0, 560
  %v271 = vld [vmem:[%s270] sm:$0xff]
  %s272 = scalar_lea.vmem %s1, 24
  %v273 = vpack.c.bf16 0.0, %v271
  %274 = vst [vmem:[%s272] sm:$0xf] %v273
  %s275 = scalar_lea.vmem %s0, 368
  %v276 = vld [vmem:[%s275] sm:$0xff]
  %s277 = scalar_lea.vmem %s1, 120
  %v278 = vpack.c.bf16 0.0, %v276
  %279 = vst [vmem:[%s277] sm:$0xf] %v278
  %s280 = scalar_lea.vmem %s0, 176
  %v281 = vld [vmem:[%s280] sm:$0xff]
  %s282 = scalar_lea.vmem %s1, 216
  %v283 = vpack.c.bf16 0.0, %v281
  %284 = vst [vmem:[%s282] sm:$0xf] %v283
  %s285 = scalar_lea.vmem %s0, 496
  %v286 = vld [vmem:[%s285] sm:$0xff]
  %s287 = scalar_lea.vmem %s1, 56
  %v288 = vpack.c.bf16 0.0, %v286
  %289 = vst [vmem:[%s287] sm:$0xf] %v288
  %s290 = scalar_lea.vmem %s0, 304
  %v291 = vld [vmem:[%s290] sm:$0xff]
  %s292 = scalar_lea.vmem %s1, 152
  %v293 = vpack.c.bf16 0.0, %v291
  %294 = vst [vmem:[%s292] sm:$0xf] %v293
  %s295 = scalar_lea.vmem %s0, 112
  %v296 = vld [vmem:[%s295] sm:$0xff]
  %s297 = scalar_lea.vmem %s1, 248
  %v298 = vpack.c.bf16 0.0, %v296
  %299 = vst [vmem:[%s297] sm:$0xf] %v298
  %s300 = scalar_lea.vmem %s0, 432
  %v301 = vld [vmem:[%s300] sm:$0xff]
  %s302 = scalar_lea.vmem %s1, 88
  %v303 = vpack.c.bf16 0.0, %v301
  %304 = vst [vmem:[%s302] sm:$0xf] %v303
  %s305 = scalar_lea.vmem %s0, 240
  %v306 = vld [vmem:[%s305] sm:$0xff]
  %s307 = scalar_lea.vmem %s1, 184
  %v308 = vpack.c.bf16 0.0, %v306
  %309 = vst [vmem:[%s307] sm:$0xf] %v308
  %s310 = scalar_lea.vmem %s0, 48
  %v311 = vld [vmem:[%s310] sm:$0xff]
  %s312 = scalar_lea.vmem %s1, 280
  %v313 = vpack.c.bf16 0.0, %v311
  %314 = vst [vmem:[%s312] sm:$0xf] %v313
  %s315 = scalar_lea.vmem %s0, 568
  %v316 = vld [vmem:[%s315] sm:$0xff]
  %s317 = scalar_lea.vmem %s1, 28
  %v318 = vpack.c.bf16 0.0, %v316
  %319 = vst [vmem:[%s317] sm:$0xf] %v318
  %s320 = scalar_lea.vmem %s0, 376
  %v321 = vld [vmem:[%s320] sm:$0xff]
  %s322 = scalar_lea.vmem %s1, 124
  %v323 = vpack.c.bf16 0.0, %v321
  %324 = vst [vmem:[%s322] sm:$0xf] %v323
  %s325 = scalar_lea.vmem %s0, 184
  %v326 = vld [vmem:[%s325] sm:$0xff]
  %s327 = scalar_lea.vmem %s1, 220
  %v328 = vpack.c.bf16 0.0, %v326
  %329 = vst [vmem:[%s327] sm:$0xf] %v328
  %s330 = scalar_lea.vmem %s0, 504
  %v331 = vld [vmem:[%s330] sm:$0xff]
  %s332 = scalar_lea.vmem %s1, 60
  %v333 = vpack.c.bf16 0.0, %v331
  %334 = vst [vmem:[%s332] sm:$0xf] %v333
  %s335 = scalar_lea.vmem %s0, 312
  %v336 = vld [vmem:[%s335] sm:$0xff]
  %s337 = scalar_lea.vmem %s1, 156
  %v338 = vpack.c.bf16 0.0, %v336
  %339 = vst [vmem:[%s337] sm:$0xf] %v338
  %s340 = scalar_lea.vmem %s0, 120
  %v341 = vld [vmem:[%s340] sm:$0xff]
  %s342 = scalar_lea.vmem %s1, 252
  %v343 = vpack.c.bf16 0.0, %v341
  %344 = vst [vmem:[%s342] sm:$0xf] %v343
  %s345 = scalar_lea.vmem %s0, 440
  %v346 = vld [vmem:[%s345] sm:$0xff]
  %s347 = scalar_lea.vmem %s1, 92
  %v348 = vpack.c.bf16 0.0, %v346
  %349 = vst [vmem:[%s347] sm:$0xf] %v348
  %s350 = scalar_lea.vmem %s0, 248
  %v351 = vld [vmem:[%s350] sm:$0xff]
  %s352 = scalar_lea.vmem %s1, 188
  %v353 = vpack.c.bf16 0.0, %v351
  %354 = vst [vmem:[%s352] sm:$0xf] %v353
  %s355 = scalar_lea.vmem %s0, 56
  %v356 = vld [vmem:[%s355] sm:$0xff]
  %s357 = scalar_lea.vmem %s1, 284
  %v358 = vpack.c.bf16 0.0, %v356
  %359 = vst [vmem:[%s357] sm:$0xf] %v358

// kernel: resnet_wild_forward.1
$region0: #{resnet_wild_forward.1}
  #allocation0 [shape = 'u32[]', space=smem, size = 0x4, offset = 0x4, fixed_abs, tag = 'smem constant byte address 0x4 - core index']
  #allocation1 [shape = 'u32[144,128]{1,0:T(1,128)}', space=vmem, size = 0x12000, scoped, tag = 'internal scratch']
  %s0 = inlined_call_operand.vmem [shape: f32[8,64], index: 0, kind: input, shape index: {}]
  %s1 = inlined_call_operand.vmem [shape: bf16[64,128], index: 1, kind: input, shape index: {}]
  %s2 = inlined_call_operand.vmem [shape: f32[1,128], index: 2, kind: input, shape index: {}]
  %s3 = inlined_call_operand.hbm [shape: f32[2,128], index: 3, kind: output, shape index: {}]
  %s4 = sld [smem:[#allocation0]]
  $region22: #{resnet_wild_forward.1} parent=0
    _
  %s6 = ssub.s32 1, %s4
  %s7 = scalar_select 0, %s6, %s4
  $region1: #{resnet_wild_forward.1} parent=0
    #allocation2 [shape = 'u8[1024]{0}', space=vmem, size = 0x400, scoped, tag = 'output window, operand 0, single buffered']
    #allocation3 [shape = 's32[1]{0}', space=sflag, size = 0x4, scoped, tag = 'scoped memory for resnet_wild_forward.1']
    %8 = vsyncpa [#allocation3], 0
    // Predicated region
    $region2: #{resnet_wild_forward.1} parent=1 // pred_check
      _
    $region3: #{resnet_wild_forward.1} parent=1 // pred_check_branch
      %10 = sbr.rel (0) target = $region5
    $region4: #{resnet_wild_forward.1} parent=1 // pred_region
      _
    $region5: #{resnet_wild_forward.1} parent=1 // pred_fallthru
      _
    // Predicated region
    $region6: #{resnet_wild_forward.1} parent=1 // pred_check
      _
    $region7: #{resnet_wild_forward.1} parent=1 // pred_check_branch
      %12 = sbr.rel (0) target = $region9
    $region8: #{resnet_wild_forward.1} parent=1 // pred_region
      _
    $region9: #{resnet_wild_forward.1} parent=1 // pred_fallthru
      _
    // Predicated region
    $region10: #{resnet_wild_forward.1} parent=1 // pred_check
      _
    $region11: #{resnet_wild_forward.1} parent=1 // pred_check_branch
      %14 = sbr.rel (0) target = $region13
    $region12: #{resnet_wild_forward.1} parent=1 // pred_region
      _
    $region13: #{resnet_wild_forward.1} parent=1 // pred_fallthru
      _
    %v16 = vld [vmem:[%s0] sm:$0xff]
    %v17 = vpack.c.bf16 %v16, %v16
    %v18 = vld [vmem:[%s1] sm:$0xf]
    %v19 = vld [vmem:[%s1 + $0x4] sm:$0xf]
    %v20 = vld [vmem:[%s1 + $0x8] sm:$0xf]
    %v21 = vld [vmem:[%s1 + $0xc] sm:$0xf]
    %v22 = vld [vmem:[%s1 + $0x10] sm:$0xf]
    %v23 = vld [vmem:[%s1 + $0x14] sm:$0xf]
    %v24 = vld [vmem:[%s1 + $0x18] sm:$0xf]
    %v25 = vld [vmem:[%s1 + $0x1c] sm:$0xf]
    %v26 = vld [vmem:[%s2] sm:$0x1]
    %v28 = vlaneseq
    %v29 = vshrl.u32 %v28, 7
    %v30 = vsub.s32 0, %v29
    %v31 = vrot.slane %v26, %v30
    %v41 = vunpack.c.l.b16 %v18
    %v42 = vunpack.c.l.b16 %v19
    %v43 = vunpack.c.l.b16 %v20
    %v44 = vunpack.c.l.b16 %v21
    %v45 = vunpack.c.l.b16 %v22
    %v46 = vunpack.c.l.b16 %v23
    %v47 = vunpack.c.l.b16 %v24
    %v48 = vunpack.c.l.b16 %v25
    %v49 = vpack.c.b16 %v42, %v41
    %v50 = vpack.c.b16 %v44, %v43
    %v51 = vpack.c.b16 %v46, %v45
    %v52 = vpack.c.b16 %v48, %v47
    %vm57 = vcmask 523264
    %v59 = vsel %vm57, %v17, 0
    %61 = vmatprep.subr.bf16.mxu0 0
    %62 = vmatpush1.bf16.msra.mxu0 %v49
    %63 = vmatprep.subr.bf16.mxu0 0
    %64 = vmatpush1.bf16.msra.mxu0 %v50
    %65 = vmatprep.subr.bf16.mxu0 0
    %66 = vmatpush1.bf16.msra.mxu0 %v51
    %67 = vmatprep.subr.bf16.mxu0 0
    %68 = vmatpush1.bf16.msra.mxu0 %v52
    %69 = vmatprep.subr.bf16.mxu0 0
    %70 = vmatpush1.bf16.msra.mxu0 0
    %71 = vmatprep.subr.bf16.mxu0 0
    %72 = vmatpush1.bf16.msra.mxu0 0
    %73 = vmatprep.subr.bf16.mxu0 0
    %74 = vmatpush1.bf16.msra.mxu0 0
    %75 = vmatprep.subr.bf16.mxu0 0
    %76 = vmatpush1.bf16.msra.mxu0 0
    %77 = vmatprep.subr.bf16.mxu0 0
    %78 = vmatpush1.bf16.msra.mxu0 0
    %79 = vmatprep.subr.bf16.mxu0 0
    %80 = vmatpush1.bf16.msra.mxu0 0
    %81 = vmatprep.subr.bf16.mxu0 0
    %82 = vmatpush1.bf16.msra.mxu0 0
    %83 = vmatprep.subr.bf16.mxu0 0
    %84 = vmatpush1.bf16.msra.mxu0 0
    %85 = vmatprep.subr.bf16.mxu0 0
    %86 = vmatpush1.bf16.msra.mxu0 0
    %87 = vmatprep.subr.bf16.mxu0 0
    %88 = vmatpush1.bf16.msra.mxu0 0
    %89 = vmatprep.subr.bf16.mxu0 0
    %90 = vmatpush1.bf16.msra.mxu0 0
    %91 = vmatprep.subr.bf16.mxu0 0
    %92 = vmatpush1.bf16.msra.mxu0 0
    %93 = vmatprep.mubr.bf16.mxu0 0
    %94 = vmatmul.mubr.bf16.gmra.mrb[0].mxu0 %v59
    %v95 = vpop.f32.mrb[0].mxu0
    %v96 = vadd.f32 %v31, %v95
    %v97 = vpop.f32.mrb[0].mxu0
    %v98 = vpop.f32.mrb[0].mxu0
    %v99 = vpop.f32.mrb[0].mxu0
    %100 = vdwg.mxu0
    %vm101 = vcmask 1043456
    %v102 = vsel %vm101, %v96, -inf
    %v103 = vrot.slane %v102, 4
    %v104 = vmax.f32 %v102, %v103
    %v105 = vrot.slane %v104, 2
    %v106 = vmax.f32 %v104, %v105
    %v107 = vrot.slane %v106, 1
    %v108 = vmax.f32 %v106, %v107
    %v109 = vsel %vm101, %v96, inf
    %v110 = vrot.slane %v109, 4
    %v111 = vmin.f32 %v109, %v110
    %v112 = vrot.slane %v111, 2
    %v113 = vmin.f32 %v111, %v112
    %v114 = vrot.slane %v113, 1
    %v115 = vmin.f32 %v113, %v114
    %v116 = vadd.f32 %v108, %v115
    %v117 = vmul.f32 %v116, 0.5
    %vm118 = vcmask 1047556
    %v119 = vsel %vm118, %v96, -inf
    %v120 = vrot.slane %v119, 4
    %v121 = vmax.f32 %v119, %v120
    %v122 = vrot.slane %v121, 2
    %v123 = vmax.f32 %v121, %v122
    %v124 = vrot.slane %v123, 1
    %v125 = vmax.f32 %v123, %v124
    %v126 = vsel %vm118, %v96, inf
    %v127 = vrot.slane %v126, 4
    %v128 = vmin.f32 %v126, %v127
    %v129 = vrot.slane %v128, 2
    %v130 = vmin.f32 %v128, %v129
    %v131 = vrot.slane %v130, 1
    %v132 = vmin.f32 %v130, %v131
    %v133 = vadd.f32 %v125, %v132
    %v134 = vmul.f32 %v133, 0.5
    %vm135 = vcmask 1040384
    %v136 = vsel %vm135, %v117, %v134
    %v137 = vsub.f32 0.0, %v136
    %v138 = vmul.f32 %v137, 1.442695
    %v139 = vpow.pop %v138
    %v140 = vadd.f32 %v139, 1.0
    %v141 = vrcp.pop %v140
    %v142 = vmax.f32 %v141, 0.0
    %v143 = vmin.f32 %v142, 1.0
    %144 = vst [vmem:[#allocation2] sm:$0x3] %v143
    // Predicated region
    $region14: #{resnet_wild_forward.1} parent=1 // pred_check
      _
    $region15: #{resnet_wild_forward.1} parent=1 // pred_check_branch
      %146 = sbr.rel (0) target = $region17
    $region16: #{resnet_wild_forward.1} parent=1 // pred_region
      %s148 = ssub.s32 32, 32
      %149 = vsyncadd [#allocation3], %s148
      %s151 = sshll.u32 [#allocation2], 4
      %s152 = int_to_ptr.vmem [resolvable:$true] %s151
      %154 = dma.vmem_to_hbm [thread:$0]  %s152, 32, %s3, [#allocation3]
    $region17: #{resnet_wild_forward.1} parent=1 // pred_fallthru
      _
    // Predicated region
    $region18: #{resnet_wild_forward.1} parent=1 // pred_check
      _
    $region19: #{resnet_wild_forward.1} parent=1 // pred_check_branch
      %156 = sbr.rel (0) target = $region21
    $region20: #{resnet_wild_forward.1} parent=1 // pred_region
      %157 = dma.done [#allocation3], 32
    $region21: #{resnet_wild_forward.1} parent=1 // pred_fallthru
      _
    %158 = vsyncpa [#allocation3], 1

</llo_original>
